<compile_context>
chip_gen: v7x
topology: tpu7x:2x2x1
jax: 0.10.0
libtpu: 0.0.40
codegen_flags: <defaults>
</compile_context>

<pallas_src>
import functools

import jax
import jax.numpy as jnp
from jax import lax
from jax.experimental import pallas as pl
from jax.experimental.pallas import tpu as pltpu

LANES = 128
SUBLANES = 8
NUM_SUMS = 6
CHUNK_ROWS = 32        # (32,128) f32 chunk = 4 vregs per temporary -> stays in registers
MAX_TILE_ROWS = 8192   # 4 MiB per f32 input block; 2 inputs x 2 buffers = 16 MiB


def _cdiv(a, b):
    return -(-a // b)


def _round_up(a, b):
    return _cdiv(a, b) * b


def _loss_sums_kernel(pred_ref, targ_ref, acc_ref, *,
                      total, tile_rows, needs_mask):
    """Accumulates six per-lane partial sums into acc_ref (f32[6, 8, 128]).

    acc_ref row layout:
      [0] sum(p*t)   [1] sum(p*p)   [2] sum(t*t)
      [3] sum(stable BCE-with-logits elementwise terms)
      [4] sum(sigmoid(p)*t)   [5] sum(sigmoid(p)**2)
    """
    i = pl.program_id(0)

    @pl.when(i == 0)
    def _init():
        acc_ref[...] = jnp.zeros_like(acc_ref)

    n_chunks = tile_rows // CHUNK_ROWS

    if needs_mask:
        # Loop-invariant intra-chunk element index; global index = base + this.
        row_ids = lax.broadcasted_iota(jnp.int32, (CHUNK_ROWS, LANES), 0)
        lane_ids = lax.broadcasted_iota(jnp.int32, (CHUNK_ROWS, LANES), 1)
        local_idx = row_ids * LANES + lane_ids
        tile_base = i * (tile_rows * LANES)

    def fold(x):
        # (CHUNK_ROWS, 128) -> (8, 128): vreg-wise adds only (pure VPU, no XLU).
        return jnp.sum(x.reshape(-1, SUBLANES, LANES), axis=0)

    def body(c, carry):
        r0 = pl.multiple_of(c * CHUNK_ROWS, CHUNK_ROWS)
        p = pred_ref[pl.ds(r0, CHUNK_ROWS), :].astype(jnp.float32)
        t = targ_ref[pl.ds(r0, CHUNK_ROWS), :].astype(jnp.float32)

        # Two EUP transcendentals per element (tanh + log), no divide:
        th = jnp.tanh(0.5 * p)
        probs = 0.5 + 0.5 * th                                # sigmoid(p)
        log_sig_abs = jnp.log(0.5 + 0.5 * jnp.abs(th))        # = -log1p(exp(-|p|))
        bce_terms = jnp.maximum(p, 0.0) - p * t - log_sig_abs
        probs_sq = probs * probs

        if needs_mask:
            # Padded tail elements carry p = t = 0, so only the two sums that
            # are non-neutral at zero need masking (BCE: log 2, sigmoid^2: .25).
            gidx = tile_base + c * (CHUNK_ROWS * LANES) + local_idx
            valid = gidx < total
            bce_terms = jnp.where(valid, bce_terms, 0.0)
            probs_sq = jnp.where(valid, probs_sq, 0.0)

        acc_ref[0] += fold(p * t)
        acc_ref[1] += fold(p * p)
        acc_ref[2] += fold(t * t)
        acc_ref[3] += fold(bce_terms)
        acc_ref[4] += fold(probs * t)
        acc_ref[5] += fold(probs_sq)
        return carry

    lax.fori_loop(0, n_chunks, body, 0)


@jax.jit
def custom_loss_metrics(pred, target):
    """JAX/Pallas equivalent of CustomLossMetrics' nested loss classes.

    pred, target: [N, C, H, W] (pred doubles as logits where needed).
    Returns scalars: dice, dice_loss, soft_dice_loss, bce_dice_loss, bce_dice.
    """
    num = pred.shape[0]
    total = pred.size
    assert target.size == total

    # Tiling: minimize grid steps (amortize ~0.35us/step) while keeping the
    # zero-padding waste below ~32 rows per tile.
    rows_needed = _cdiv(total, LANES)
    num_tiles = _cdiv(rows_needed, MAX_TILE_ROWS)
    tile_rows = _round_up(_cdiv(rows_needed, num_tiles), CHUNK_ROWS)
    rows_padded = num_tiles * tile_rows
    padded_total = rows_padded * LANES
    needs_mask = padded_total != total
    if needs_mask:
        assert padded_total < 2 ** 31, "masked-tail path uses int32 indices"

    # Stream native dtype (no f32 cast in the wrapper); cast happens in-kernel.
    p_flat = pred.reshape(-1)
    t_flat = target.reshape(-1)
    if needs_mask:
        # TODO(synk): for very large unaligned inputs this zero-pad is one extra
        # HBM pass; a memory_space=pl.ANY + manual-DMA tail would avoid it.
        pad = padded_total - total
        p_flat = jnp.pad(p_flat, (0, pad))
        t_flat = jnp.pad(t_flat, (0, pad))
    p2d = p_flat.reshape(rows_padded, LANES)
    t2d = t_flat.reshape(rows_padded, LANES)

    # VMEM budget: 2 inputs x 2 pipeline buffers x one block + accumulator +
    # chunk temporaries.  Kept <= 32 MiB so the identical plan compiles on
    # v5e/v6e (128 MiB VMEM) and v7x (64 MiB, 32 MiB scoped default).
    blk_bytes = (tile_rows * LANES * jnp.dtype(pred.dtype).itemsize
                 + tile_rows * LANES * jnp.dtype(target.dtype).itemsize)
    vmem_limit = int(min(32 * 1024 * 1024,
                         max(16 * 1024 * 1024, 2 * blk_bytes + 8 * 1024 * 1024)))

    kernel = functools.partial(_loss_sums_kernel, total=total,
                               tile_rows=tile_rows, needs_mask=needs_mask)

    partial_sums = pl.pallas_call(
        kernel,
        out_shape=jax.ShapeDtypeStruct((NUM_SUMS, SUBLANES, LANES), jnp.float32),
        grid_spec=pltpu.PrefetchScalarGridSpec(
            num_scalar_prefetch=0,
            grid=(num_tiles,),
            in_specs=[
                pl.BlockSpec((tile_rows, LANES), lambda i: (i, 0)),
                pl.BlockSpec((tile_rows, LANES), lambda i: (i, 0)),
            ],
            out_specs=pl.BlockSpec((NUM_SUMS, SUBLANES, LANES),
                                   lambda i: (0, 0, 0)),
        ),
        # TODO(synk): on v7x, shard the row stream across both TensorCores with
        # a leading CORE_PARALLEL grid axis and per-core partial-sum rows.
        compiler_params=pltpu.CompilerParams(
            dimension_semantics=("arbitrary",),
            vmem_limit_bytes=vmem_limit),
    )(p2d, t2d)

    # Final cross-lane reduction (tiny) + scalar epilogue in plain JAX.
    sums = jnp.sum(partial_sums, axis=(1, 2))  # (6,)
    s_it, s_pp, s_tt, s_bce, s_st, s_ss = (
        sums[0], sums[1], sums[2], sums[3], sums[4], sums[5])

    smooth = 1.0
    # Dice / DiceLoss (on raw pred)
    dice = (2.0 * s_it + smooth) / (s_pp + s_tt + smooth)
    dice_loss = 1.0 - dice / num
    # SoftDiceLoss (on sigmoid(pred))
    soft_dice = (2.0 * s_st + smooth) / (s_ss + s_tt + smooth)
    soft_dice_loss = 1.0 - soft_dice / num
    # BCEWithLogitsLoss (mean reduction)
    bce = s_bce / jnp.float32(total)
    # BceDiceLoss / BceDice
    bce_dice_loss = (2.0 * bce + 1.0 * dice_loss) / 3.0
    bce_dice = bce - dice

    return {
        "dice": dice,
        "dice_loss": dice_loss,
        "soft_dice_loss": soft_dice_loss,
        "bce_dice_loss": bce_dice_loss,
        "bce_dice": bce_dice,
    }


def _reference(pred, target):
    p = pred.reshape(-1).astype(jnp.float32)
    t = target.reshape(-1).astype(jnp.float32)
    num = pred.shape[0]
    smooth = 1.0
    dice = (2.0 * jnp.sum(p * t) + smooth) / (jnp.sum(p * p) + jnp.sum(t * t) + smooth)
    dice_loss = 1.0 - dice / num
    probs = jax.nn.sigmoid(p)
    soft_dice = (2.0 * jnp.sum(probs * t) + smooth) / (
        jnp.sum(probs * probs) + jnp.sum(t * t) + smooth)
    soft_dice_loss = 1.0 - soft_dice / num
    bce = jnp.mean(jnp.maximum(p, 0.0) - p * t + jnp.log1p(jnp.exp(-jnp.abs(p))))
    return {
        "dice": dice,
        "dice_loss": dice_loss,
        "soft_dice_loss": soft_dice_loss,
        "bce_dice_loss": (2.0 * bce + dice_loss) / 3.0,
        "bce_dice": bce - dice,
    }


if __name__ == "__main__":
    key = jax.random.PRNGKey(0)
    k1, k2, k3, k4 = jax.random.split(key, 4)

    # NCHW logits + binary mask.  (2,4,16,16) = 2048 elements: exercises the
    # zero-padded / in-kernel-masked tail path (2048 < one 32-row tile).
    pred1 = jax.random.normal(k1, (2, 4, 16, 16), dtype=jnp.float32)
    targ1 = (jax.random.uniform(k2, (2, 4, 16, 16)) > 0.5).astype(jnp.float32)

    # (2,4,32,64) = 16384 elements: exercises the aligned fast path (no pad,
    # no masking) and a multi-chunk inner fori_loop.
    pred2 = jax.random.normal(k3, (2, 4, 32, 64), dtype=jnp.float32)
    targ2 = (jax.random.uniform(k4, (2, 4, 32, 64)) > 0.5).astype(jnp.float32)

    for pred, targ in ((pred1, targ1), (pred2, targ2)):
        out = custom_loss_metrics(pred, targ)
        out = {k: jax.block_until_ready(v) for k, v in out.items()}
        ref = _reference(pred, targ)
        for k in out:
            a, b = float(out[k]), float(ref[k])
            assert abs(a - b) <= 1e-4 + 1e-4 * abs(b), (k, a, b)

    print("KERNEL_OK")
</pallas_src>

<mosaic_0001>
module attributes {stable_mosaic.version = 11 : i64} {
  func.func @_loss_sums_kernel(%arg0: i32, %arg1: memref<32x128xf32, #tpu.memory_space<vmem>>, %arg2: memref<32x128xf32, #tpu.memory_space<vmem>>, %arg3: memref<6x8x128xf32, #tpu.memory_space<vmem>>) attributes {dimension_semantics = [#tpu.dimension_semantics<arbitrary>], iteration_bounds = array<i64: 1>, scalar_prefetch = 0 : i64, scratch_operands = 0 : i64, tpu.core_type = #tpu.core_type<tc>, window_params = [{transform_indices = @transform_0, window_bounds = array<i64: 32, 128>}, {transform_indices = @transform_1, window_bounds = array<i64: 32, 128>}, {pipeline_mode = #tpu.pipeline_mode<synchronous>, transform_indices = @transform_2, window_bounds = array<i64: 6, 8, 128>}]} {
    %c0_i32 = arith.constant 0 : i32
    %0 = arith.cmpi eq, %arg0, %c0_i32 : i32
    %1 = arith.extui %0 : i1 to i32
    %c0_i32_0 = arith.constant 0 : i32
    %2 = arith.cmpi ne, %1, %c0_i32_0 : i32
    scf.if %2 {
      %cst_48 = arith.constant 0.000000e+00 : f32
      %96 = vector.broadcast %cst_48 : f32 to vector<6x8x128xf32>
      %c0_49 = arith.constant 0 : index
      %c0_50 = arith.constant 0 : index
      %c0_51 = arith.constant 0 : index
      %97 = vector.load %arg3[%c0_49, %c0_50, %c0_51] : memref<6x8x128xf32, #tpu.memory_space<vmem>>, vector<6x8x128xf32>
      tpu.vector_store %arg3[%c0_49, %c0_50, %c0_51], %96 {strides = array<i32>} : memref<6x8x128xf32, #tpu.memory_space<vmem>>, vector<6x8x128xf32>,
    } else {
    }
    %3 = tpu.iota {dimensions = array<i32: 0>} : vector<32x128xi32>
    %4 = tpu.iota {dimensions = array<i32: 1>} : vector<32x128xi32>
    %c128_i32 = arith.constant 128 : i32
    %5 = vector.broadcast %c128_i32 : i32 to vector<32x128xi32>
    %6 = arith.muli %3, %5 : vector<32x128xi32>
    %7 = arith.addi %6, %4 : vector<32x128xi32>
    %c4096_i32 = arith.constant 4096 : i32
    %8 = arith.muli %arg0, %c4096_i32 : i32
    %c0_i32_1 = arith.constant 0 : i32
    %c32_i32 = arith.constant 32 : i32
    %9 = arith.muli %c0_i32_1, %c32_i32 : i32
    %10 = tpu.assume_multiple %9, 32 : i32
    %11 = arith.index_cast %10 : i32 to index
    %c0 = arith.constant 0 : index
    %12 = vector.load %arg1[%11, %c0] : memref<32x128xf32, #tpu.memory_space<vmem>>, vector<32x128xf32>
    %13 = arith.index_cast %10 : i32 to index
    %c0_2 = arith.constant 0 : index
    %14 = vector.load %arg2[%13, %c0_2] : memref<32x128xf32, #tpu.memory_space<vmem>>, vector<32x128xf32>
    %cst = arith.constant 5.000000e-01 : f32
    %15 = vector.broadcast %cst : f32 to vector<32x128xf32>
    %16 = arith.mulf %15, %12 : vector<32x128xf32>
    %17 = math.tanh %16 : vector<32x128xf32>
    %cst_3 = arith.constant 5.000000e-01 : f32
    %18 = vector.broadcast %cst_3 : f32 to vector<32x128xf32>
    %19 = arith.mulf %18, %17 : vector<32x128xf32>
    %cst_4 = arith.constant 5.000000e-01 : f32
    %20 = vector.broadcast %cst_4 : f32 to vector<32x128xf32>
    %21 = arith.addf %20, %19 : vector<32x128xf32>
    %22 = math.absf %17 : vector<32x128xf32>
    %cst_5 = arith.constant 5.000000e-01 : f32
    %23 = vector.broadcast %cst_5 : f32 to vector<32x128xf32>
    %24 = arith.mulf %23, %22 : vector<32x128xf32>
    %cst_6 = arith.constant 5.000000e-01 : f32
    %25 = vector.broadcast %cst_6 : f32 to vector<32x128xf32>
    %26 = arith.addf %25, %24 : vector<32x128xf32>
    %27 = math.log %26 : vector<32x128xf32>
    %cst_7 = arith.constant 0.000000e+00 : f32
    %28 = vector.broadcast %cst_7 : f32 to vector<32x128xf32>
    %29 = arith.maximumf %12, %28 : vector<32x128xf32>
    %30 = arith.mulf %12, %14 : vector<32x128xf32>
    %31 = arith.subf %29, %30 : vector<32x128xf32>
    %32 = arith.subf %31, %27 : vector<32x128xf32>
    %33 = arith.mulf %21, %21 : vector<32x128xf32>
    %c4096_i32_8 = arith.constant 4096 : i32
    %34 = arith.muli %c0_i32_1, %c4096_i32_8 : i32
    %35 = arith.addi %8, %34 : i32
    %36 = vector.broadcast %35 : i32 to vector<32x128xi32>
    %37 = arith.addi %36, %7 : vector<32x128xi32>
    %c2048_i32 = arith.constant 2048 : i32
    %38 = vector.broadcast %c2048_i32 : i32 to vector<32x128xi32>
    %39 = arith.cmpi slt, %37, %38 : vector<32x128xi32>
    %cst_9 = arith.constant 0.000000e+00 : f32
    %40 = vector.broadcast %cst_9 : f32 to vector<32x128xf32>
    %41 = arith.select %39, %32, %40 : vector<32x128xi1>, vector<32x128xf32>
    %cst_10 = arith.constant 0.000000e+00 : f32
    %42 = vector.broadcast %cst_10 : f32 to vector<32x128xf32>
    %43 = arith.select %39, %33, %42 : vector<32x128xi1>, vector<32x128xf32>
    %c0_11 = arith.constant 0 : index
    %c0_12 = arith.constant 0 : index
    %c0_13 = arith.constant 0 : index
    %44 = vector.load %arg3[%c0_11, %c0_12, %c0_13] : memref<6x8x128xf32, #tpu.memory_space<vmem>>, vector<1x8x128xf32>
    %45 = vector.shape_cast %44 : vector<1x8x128xf32> to vector<8x128xf32>
    %46 = arith.mulf %12, %14 : vector<32x128xf32>
    %47 = vector.shape_cast %46 : vector<32x128xf32> to vector<4x8x128xf32>
    %cst_14 = arith.constant dense<0.000000e+00> : vector<8x128xf32>
    %48 = vector.multi_reduction <add>, %47, %cst_14 [0] : vector<4x8x128xf32> to vector<8x128xf32>
    %49 = arith.addf %45, %48 : vector<8x128xf32>
    %c0_15 = arith.constant 0 : index
    %c0_16 = arith.constant 0 : index
    %c0_17 = arith.constant 0 : index
    %50 = vector.load %arg3[%c0_15, %c0_16, %c0_17] : memref<6x8x128xf32, #tpu.memory_space<vmem>>, vector<1x8x128xf32>
    %51 = vector.shape_cast %50 : vector<1x8x128xf32> to vector<8x128xf32>
    %52 = vector.shape_cast %49 : vector<8x128xf32> to vector<1x8x128xf32>
    tpu.vector_store %arg3[%c0_15, %c0_16, %c0_17], %52 {strides = array<i32>} : memref<6x8x128xf32, #tpu.memory_space<vmem>>, vector<1x8x128xf32>,
    %c1 = arith.constant 1 : index
    %c0_18 = arith.constant 0 : index
    %c0_19 = arith.constant 0 : index
    %53 = vector.load %arg3[%c1, %c0_18, %c0_19] : memref<6x8x128xf32, #tpu.memory_space<vmem>>, vector<1x8x128xf32>
    %54 = vector.shape_cast %53 : vector<1x8x128xf32> to vector<8x128xf32>
    %55 = arith.mulf %12, %12 : vector<32x128xf32>
    %56 = vector.shape_cast %55 : vector<32x128xf32> to vector<4x8x128xf32>
    %cst_20 = arith.constant dense<0.000000e+00> : vector<8x128xf32>
    %57 = vector.multi_reduction <add>, %56, %cst_20 [0] : vector<4x8x128xf32> to vector<8x128xf32>
    %58 = arith.addf %54, %57 : vector<8x128xf32>
    %c1_21 = arith.constant 1 : index
    %c0_22 = arith.constant 0 : index
    %c0_23 = arith.constant 0 : index
    %59 = vector.load %arg3[%c1_21, %c0_22, %c0_23] : memref<6x8x128xf32, #tpu.memory_space<vmem>>, vector<1x8x128xf32>
    %60 = vector.shape_cast %59 : vector<1x8x128xf32> to vector<8x128xf32>
    %61 = vector.shape_cast %58 : vector<8x128xf32> to vector<1x8x128xf32>
    tpu.vector_store %arg3[%c1_21, %c0_22, %c0_23], %61 {strides = array<i32>} : memref<6x8x128xf32, #tpu.memory_space<vmem>>, vector<1x8x128xf32>,
    %c2 = arith.constant 2 : index
    %c0_24 = arith.constant 0 : index
    %c0_25 = arith.constant 0 : index
    %62 = vector.load %arg3[%c2, %c0_24, %c0_25] : memref<6x8x128xf32, #tpu.memory_space<vmem>>, vector<1x8x128xf32>
    %63 = vector.shape_cast %62 : vector<1x8x128xf32> to vector<8x128xf32>
    %64 = arith.mulf %14, %14 : vector<32x128xf32>
    %65 = vector.shape_cast %64 : vector<32x128xf32> to vector<4x8x128xf32>
    %cst_26 = arith.constant dense<0.000000e+00> : vector<8x128xf32>
    %66 = vector.multi_reduction <add>, %65, %cst_26 [0] : vector<4x8x128xf32> to vector<8x128xf32>
    %67 = arith.addf %63, %66 : vector<8x128xf32>
    %c2_27 = arith.constant 2 : index
    %c0_28 = arith.constant 0 : index
    %c0_29 = arith.constant 0 : index
    %68 = vector.load %arg3[%c2_27, %c0_28, %c0_29] : memref<6x8x128xf32, #tpu.memory_space<vmem>>, vector<1x8x128xf32>
    %69 = vector.shape_cast %68 : vector<1x8x128xf32> to vector<8x128xf32>
    %70 = vector.shape_cast %67 : vector<8x128xf32> to vector<1x8x128xf32>
    tpu.vector_store %arg3[%c2_27, %c0_28, %c0_29], %70 {strides = array<i32>} : memref<6x8x128xf32, #tpu.memory_space<vmem>>, vector<1x8x128xf32>,
    %c3 = arith.constant 3 : index
    %c0_30 = arith.constant 0 : index
    %c0_31 = arith.constant 0 : index
    %71 = vector.load %arg3[%c3, %c0_30, %c0_31] : memref<6x8x128xf32, #tpu.memory_space<vmem>>, vector<1x8x128xf32>
    %72 = vector.shape_cast %71 : vector<1x8x128xf32> to vector<8x128xf32>
    %73 = vector.shape_cast %41 : vector<32x128xf32> to vector<4x8x128xf32>
    %cst_32 = arith.constant dense<0.000000e+00> : vector<8x128xf32>
    %74 = vector.multi_reduction <add>, %73, %cst_32 [0] : vector<4x8x128xf32> to vector<8x128xf32>
    %75 = arith.addf %72, %74 : vector<8x128xf32>
    %c3_33 = arith.constant 3 : index
    %c0_34 = arith.constant 0 : index
    %c0_35 = arith.constant 0 : index
    %76 = vector.load %arg3[%c3_33, %c0_34, %c0_35] : memref<6x8x128xf32, #tpu.memory_space<vmem>>, vector<1x8x128xf32>
    %77 = vector.shape_cast %76 : vector<1x8x128xf32> to vector<8x128xf32>
    %78 = vector.shape_cast %75 : vector<8x128xf32> to vector<1x8x128xf32>
    tpu.vector_store %arg3[%c3_33, %c0_34, %c0_35], %78 {strides = array<i32>} : memref<6x8x128xf32, #tpu.memory_space<vmem>>, vector<1x8x128xf32>,
    %c4 = arith.constant 4 : index
    %c0_36 = arith.constant 0 : index
    %c0_37 = arith.constant 0 : index
    %79 = vector.load %arg3[%c4, %c0_36, %c0_37] : memref<6x8x128xf32, #tpu.memory_space<vmem>>, vector<1x8x128xf32>
    %80 = vector.shape_cast %79 : vector<1x8x128xf32> to vector<8x128xf32>
    %81 = arith.mulf %21, %14 : vector<32x128xf32>
    %82 = vector.shape_cast %81 : vector<32x128xf32> to vector<4x8x128xf32>
    %cst_38 = arith.constant dense<0.000000e+00> : vector<8x128xf32>
    %83 = vector.multi_reduction <add>, %82, %cst_38 [0] : vector<4x8x128xf32> to vector<8x128xf32>
    %84 = arith.addf %80, %83 : vector<8x128xf32>
    %c4_39 = arith.constant 4 : index
    %c0_40 = arith.constant 0 : index
    %c0_41 = arith.constant 0 : index
    %85 = vector.load %arg3[%c4_39, %c0_40, %c0_41] : memref<6x8x128xf32, #tpu.memory_space<vmem>>, vector<1x8x128xf32>
    %86 = vector.shape_cast %85 : vector<1x8x128xf32> to vector<8x128xf32>
    %87 = vector.shape_cast %84 : vector<8x128xf32> to vector<1x8x128xf32>
    tpu.vector_store %arg3[%c4_39, %c0_40, %c0_41], %87 {strides = array<i32>} : memref<6x8x128xf32, #tpu.memory_space<vmem>>, vector<1x8x128xf32>,
    %c5 = arith.constant 5 : index
    %c0_42 = arith.constant 0 : index
    %c0_43 = arith.constant 0 : index
    %88 = vector.load %arg3[%c5, %c0_42, %c0_43] : memref<6x8x128xf32, #tpu.memory_space<vmem>>, vector<1x8x128xf32>
    %89 = vector.shape_cast %88 : vector<1x8x128xf32> to vector<8x128xf32>
    %90 = vector.shape_cast %43 : vector<32x128xf32> to vector<4x8x128xf32>
    %cst_44 = arith.constant dense<0.000000e+00> : vector<8x128xf32>
    %91 = vector.multi_reduction <add>, %90, %cst_44 [0] : vector<4x8x128xf32> to vector<8x128xf32>
    %92 = arith.addf %89, %91 : vector<8x128xf32>
    %c5_45 = arith.constant 5 : index
    %c0_46 = arith.constant 0 : index
    %c0_47 = arith.constant 0 : index
    %93 = vector.load %arg3[%c5_45, %c0_46, %c0_47] : memref<6x8x128xf32, #tpu.memory_space<vmem>>, vector<1x8x128xf32>
    %94 = vector.shape_cast %93 : vector<1x8x128xf32> to vector<8x128xf32>
    %95 = vector.shape_cast %92 : vector<8x128xf32> to vector<1x8x128xf32>
    tpu.vector_store %arg3[%c5_45, %c0_46, %c0_47], %95 {strides = array<i32>} : memref<6x8x128xf32, #tpu.memory_space<vmem>>, vector<1x8x128xf32>,
    %c1_i32 = arith.constant 1 : i32
    return
  }
  func.func @transform_0(%arg0: i32) -> (i32, i32) {
    %c0_i32 = arith.constant 0 : i32
    %c0_i32_0 = arith.constant 0 : i32
    return %arg0, %c0_i32 : i32, i32
  }
  func.func @transform_1(%arg0: i32) -> (i32, i32) {
    %c0_i32 = arith.constant 0 : i32
    %c0_i32_0 = arith.constant 0 : i32
    return %arg0, %c0_i32 : i32, i32
  }
  func.func @transform_2(%arg0: i32) -> (i32, i32, i32) {
    %c0_i32 = arith.constant 0 : i32
    %c0_i32_0 = arith.constant 0 : i32
    %c0_i32_1 = arith.constant 0 : i32
    %c0_i32_2 = arith.constant 0 : i32
    return %c0_i32, %c0_i32_0, %c0_i32_1 : i32, i32, i32
  }
}

</mosaic_0001>

<llo_original>
// kernel: custom_loss_metrics.1
$region0: #{custom_loss_metrics.1}
  #allocation0 [shape = 'u32[]', space=smem, size = 0x4, offset = 0x4, fixed_abs, tag = 'smem constant byte address 0x4 - core index']
  #allocation1 [shape = 'u32[144,128]{1,0:T(1,128)}', space=vmem, size = 0x12000, scoped, tag = 'internal scratch']
  %s0 = inlined_call_operand.vmem [shape: f32[32,128], index: 0, kind: input, shape index: {}]
  %s1 = inlined_call_operand.vmem [shape: f32[32,128], index: 1, kind: input, shape index: {}]
  %s2 = inlined_call_operand.vmem [shape: f32[6,8,128], index: 2, kind: output, shape index: {}]
  %s3 = sld [smem:[#allocation0]]
  $region22: #{custom_loss_metrics.1} parent=0
    _
  %s5 = ssub.s32 1, %s3
  %s6 = scalar_select 0, %s5, %s3
  // Predicated region
  $region2: #{custom_loss_metrics.1} parent=0 // pred_check
    _
  $region3: #{custom_loss_metrics.1} parent=0 // pred_check_branch
    %8 = sbr.rel (0) target = $region5
  $region4: #{custom_loss_metrics.1} parent=0 // pred_region
    _
  $region5: #{custom_loss_metrics.1} parent=0 // pred_fallthru
    _
  // Predicated region
  $region6: #{custom_loss_metrics.1} parent=0 // pred_check
    _
  $region7: #{custom_loss_metrics.1} parent=0 // pred_check_branch
    %10 = sbr.rel (0) target = $region9
  $region8: #{custom_loss_metrics.1} parent=0 // pred_region
    _
  $region9: #{custom_loss_metrics.1} parent=0 // pred_fallthru
    _
  %p11 = scmp.eq.s32.totalorder 0, 0
  // Predicated region
  $region10: #{custom_loss_metrics.1} parent=0 // pred_check
    %p12 = pneg %p11
  $region11: #{custom_loss_metrics.1} parent=0 // pred_check_branch
    %14 = sbr.rel (%p12) target = $region13
  $region12: #{custom_loss_metrics.1} parent=0 // pred_region
    %15 = vst [vmem:[%s2] sm:$0xff] 0.0
    %16 = vst [vmem:[%s2 + $0x8] sm:$0xff] 0.0
    %17 = vst [vmem:[%s2 + $0x10] sm:$0xff] 0.0
    %18 = vst [vmem:[%s2 + $0x18] sm:$0xff] 0.0
    %19 = vst [vmem:[%s2 + $0x20] sm:$0xff] 0.0
    %20 = vst [vmem:[%s2 + $0x28] sm:$0xff] 0.0
  $region13: #{custom_loss_metrics.1} parent=0 // pred_fallthru
    _
  %v21 = vlaneseq
  %v22 = vshrl.u32 %v21, 7
  %v23 = vadd.s32 %v22, 8
  %v24 = vadd.s32 %v22, 16
  %v25 = vadd.s32 %v22, 24
  %v26 = vlaneseq
  %v27 = vand.u32 %v26, 127
  %v28 = vmul.u32 %v22, 128
  %v29 = vmul.u32 %v23, 128
  %v30 = vmul.u32 %v24, 128
  %v31 = vmul.u32 %v25, 128
  %v32 = vadd.s32 %v28, %v27
  %v33 = vadd.s32 %v29, %v27
  %v34 = vadd.s32 %v30, %v27
  %v35 = vadd.s32 %v31, %v27
  %s36 = smul.u32 0, 4096
  %v37 = vld [vmem:[%s0] sm:$0xff]
  %v38 = vld [vmem:[%s0 + $0x8] sm:$0xff]
  %v39 = vld [vmem:[%s0 + $0x10] sm:$0xff]
  %v40 = vld [vmem:[%s0 + $0x18] sm:$0xff]
  %v41 = vld [vmem:[%s1] sm:$0xff]
  %v42 = vld [vmem:[%s1 + $0x8] sm:$0xff]
  %v43 = vld [vmem:[%s1 + $0x10] sm:$0xff]
  %v44 = vld [vmem:[%s1 + $0x18] sm:$0xff]
  %v45 = vmul.f32 %v37, 0.5
  %v46 = vmul.f32 %v38, 0.5
  %v47 = vmul.f32 %v39, 0.5
  %v48 = vmul.f32 %v40, 0.5
  %v49 = vtanh.pop %v45
  %v50 = vtanh.pop %v46
  %v51 = vtanh.pop %v47
  %v52 = vtanh.pop %v48
  %v53 = vmul.f32 %v49, 0.5
  %v54 = vmul.f32 %v50, 0.5
  %v55 = vmul.f32 %v51, 0.5
  %v56 = vmul.f32 %v52, 0.5
  %v57 = vadd.f32 %v53, 0.5
  %v58 = vadd.f32 %v54, 0.5
  %v59 = vadd.f32 %v55, 0.5
  %v60 = vadd.f32 %v56, 0.5
  %v61 = vand.u32 2147483647, %v49
  %v62 = vand.u32 2147483647, %v50
  %v63 = vand.u32 2147483647, %v51
  %v64 = vand.u32 2147483647, %v52
  %v65 = vmul.f32 %v61, 0.5
  %v66 = vmul.f32 %v62, 0.5
  %v67 = vmul.f32 %v63, 0.5
  %v68 = vmul.f32 %v64, 0.5
  %v69 = vadd.f32 %v65, 0.5
  %v70 = vadd.f32 %v66, 0.5
  %v71 = vadd.f32 %v67, 0.5
  %v72 = vadd.f32 %v68, 0.5
  %v73 = vlog2.pop %v69
  %v74 = vmul.f32 %v73, 0.6931472
  %v75 = vlog2.pop %v70
  %v76 = vmul.f32 %v75, 0.6931472
  %v77 = vlog2.pop %v71
  %v78 = vmul.f32 %v77, 0.6931472
  %v79 = vlog2.pop %v72
  %v80 = vmul.f32 %v79, 0.6931472
  %v81 = vmax.f32 %v37, 0.0
  %v82 = vmax.f32 %v38, 0.0
  %v83 = vmax.f32 %v39, 0.0
  %v84 = vmax.f32 %v40, 0.0
  %v85 = vmul.f32 %v37, %v41
  %v86 = vmul.f32 %v38, %v42
  %v87 = vmul.f32 %v39, %v43
  %v88 = vmul.f32 %v40, %v44
  %v89 = vsub.f32 %v81, %v85
  %v90 = vsub.f32 %v82, %v86
  %v91 = vsub.f32 %v83, %v87
  %v92 = vsub.f32 %v84, %v88
  %v93 = vsub.f32 %v89, %v74
  %v94 = vsub.f32 %v90, %v76
  %v95 = vsub.f32 %v91, %v78
  %v96 = vsub.f32 %v92, %v80
  %v97 = vmul.f32 %v57, %v57
  %v98 = vmul.f32 %v58, %v58
  %v99 = vmul.f32 %v59, %v59
  %v100 = vmul.f32 %v60, %v60
  %v101 = vstv %s36
  %v102 = vadd.s32 %v101, %v32
  %v103 = vadd.s32 %v101, %v33
  %v104 = vadd.s32 %v101, %v34
  %v105 = vadd.s32 %v101, %v35
  %vm106 = vcmp.lt.s32.totalorder %v102, 2048
  %vm107 = vcmp.lt.s32.totalorder %v103, 2048
  %vm108 = vcmp.lt.s32.totalorder %v104, 2048
  %vm109 = vcmp.lt.s32.totalorder %v105, 2048
  %v110 = vsel %vm106, %v93, 0.0
  %v111 = vsel %vm107, %v94, 0.0
  %v112 = vsel %vm108, %v95, 0.0
  %v113 = vsel %vm109, %v96, 0.0
  %v114 = vsel %vm106, %v97, 0.0
  %v115 = vsel %vm107, %v98, 0.0
  %v116 = vsel %vm108, %v99, 0.0
  %v117 = vsel %vm109, %v100, 0.0
  %v118 = vld [vmem:[%s2] sm:$0xff]
  %v119 = vadd.f32 %v85, %v86
  %v120 = vadd.f32 %v119, %v87
  %v121 = vadd.f32 %v120, %v88
  %v122 = vadd.f32 %v118, %v121
  %123 = vst [vmem:[%s2] sm:$0xff] %v122
  %s124 = scalar_lea.vmem %s2, 8
  %v125 = vld [vmem:[%s124] sm:$0xff]
  %v126 = vmul.f32 %v37, %v37
  %v127 = vmul.f32 %v38, %v38
  %v128 = vmul.f32 %v39, %v39
  %v129 = vmul.f32 %v40, %v40
  %v130 = vadd.f32 %v126, %v127
  %v131 = vadd.f32 %v130, %v128
  %v132 = vadd.f32 %v131, %v129
  %v133 = vadd.f32 %v125, %v132
  %134 = vst [vmem:[%s124] sm:$0xff] %v133
  %s135 = scalar_lea.vmem %s2, 16
  %v136 = vld [vmem:[%s135] sm:$0xff]
  %v137 = vmul.f32 %v41, %v41
  %v138 = vmul.f32 %v42, %v42
  %v139 = vmul.f32 %v43, %v43
  %v140 = vmul.f32 %v44, %v44
  %v141 = vadd.f32 %v137, %v138
  %v142 = vadd.f32 %v141, %v139
  %v143 = vadd.f32 %v142, %v140
  %v144 = vadd.f32 %v136, %v143
  %145 = vst [vmem:[%s135] sm:$0xff] %v144
  %s146 = scalar_lea.vmem %s2, 24
  %v147 = vld [vmem:[%s146] sm:$0xff]
  %v148 = vadd.f32 %v110, %v111
  %v149 = vadd.f32 %v148, %v112
  %v150 = vadd.f32 %v149, %v113
  %v151 = vadd.f32 %v147, %v150
  %152 = vst [vmem:[%s146] sm:$0xff] %v151
  %s153 = scalar_lea.vmem %s2, 32
  %v154 = vld [vmem:[%s153] sm:$0xff]
  %v155 = vmul.f32 %v57, %v41
  %v156 = vmul.f32 %v58, %v42
  %v157 = vmul.f32 %v59, %v43
  %v158 = vmul.f32 %v60, %v44
  %v159 = vadd.f32 %v155, %v156
  %v160 = vadd.f32 %v159, %v157
  %v161 = vadd.f32 %v160, %v158
  %v162 = vadd.f32 %v154, %v161
  %163 = vst [vmem:[%s153] sm:$0xff] %v162
  %s164 = scalar_lea.vmem %s2, 40
  %v165 = vld [vmem:[%s164] sm:$0xff]
  %v166 = vadd.f32 %v114, %v115
  %v167 = vadd.f32 %v166, %v116
  %v168 = vadd.f32 %v167, %v117
  %v169 = vadd.f32 %v165, %v168
  %170 = vst [vmem:[%s164] sm:$0xff] %v169
  // Predicated region
  $region14: #{custom_loss_metrics.1} parent=0 // pred_check
    _
  $region15: #{custom_loss_metrics.1} parent=0 // pred_check_branch
    %172 = sbr.rel (0) target = $region17
  $region16: #{custom_loss_metrics.1} parent=0 // pred_region
    _
  $region17: #{custom_loss_metrics.1} parent=0 // pred_fallthru
    _
  // Predicated region
  $region18: #{custom_loss_metrics.1} parent=0 // pred_check
    _
  $region19: #{custom_loss_metrics.1} parent=0 // pred_check_branch
    %174 = sbr.rel (0) target = $region21
  $region20: #{custom_loss_metrics.1} parent=0 // pred_region
    _
  $region21: #{custom_loss_metrics.1} parent=0 // pred_fallthru
    _

</llo_original>
